<compile_context>
chip_gen: v7x
topology: tpu7x:2x2x1
jax: 0.10.0
libtpu: 0.0.40
codegen_flags: <defaults>
</compile_context>

<pallas_src>
import functools

import jax
import jax.numpy as jnp
from jax import lax
from jax.experimental import pallas as pl
from jax.experimental.pallas import tpu as pltpu


def _inv_pow(div, beta):
    """div**(-beta) for div > 0 without an f32 divide (EUP rsqrt/sqrt/exp)."""
    if abs(beta - 0.75) < 1e-12:
        return lax.rsqrt(div) * lax.rsqrt(jnp.sqrt(div))      # div**-0.75
    if abs(beta - 0.5) < 1e-12:
        return lax.rsqrt(div)
    if abs(beta - 1.0) < 1e-12:
        return pl.reciprocal(div)
    return jnp.exp(-beta * jnp.log(div))                       # general beta


# ----------------------------------------------------------------------------
# ACROSS_CHANNELS = False (module default): spatial window per (n, c) plane.
# Kernel block: (B, H, W) independent planes; H on sublanes, W on lanes.
# ----------------------------------------------------------------------------
def _lrn_spatial_kernel(x_ref, o_ref, p_ref, *, ls, pad, alpha, beta, bias):
    _, h, w = x_ref.shape
    x = x_ref[...]                                    # (B, H, W)

    # Zero-halo x^2 along H in a VMEM scratch (no jnp.pad / HBM round trip).
    p_ref[...] = jnp.zeros_like(p_ref)
    p_ref[:, pad:pad + h, :] = x * x

    # Separable window sum: ls H-shifted adds ...
    r = p_ref[:, 0:h, :]
    for dh in range(1, ls):
        r = r + p_ref[:, dh:dh + h, :]                # (B, H, W)

    # ... then ls W-shifted adds, masking the edge taps (lane rolls + select,
    # so there are no lane-offset slices or stores).
    s = r
    if pad > 0:
        lane = lax.broadcasted_iota(jnp.int32, r.shape, 2)
        for d in range(1, pad + 1):
            s = s + jnp.where(lane < w - d,
                              pltpu.roll(r, shift=w - d, axis=2), 0.0)  # r[., j+d]
            s = s + jnp.where(lane >= d,
                              pltpu.roll(r, shift=d, axis=2), 0.0)      # r[., j-d]

    div = s * (alpha / float(ls * ls)) + bias         # count_include_pad=True
    o_ref[...] = (x * _inv_pow(div, beta)).astype(o_ref.dtype)


def _plane_block(planes, plane_bytes):
    # Aim for >= 4 grid steps (2 per v7x TensorCore, pipeline depth > 1 on a
    # single core) while keeping per-step blocks small vs. the VMEM budget.
    cap = max(1, (8 << 20) // max(plane_bytes, 1))
    blk = min(max(planes // 4, 1), cap)
    while planes % blk:
        blk -= 1
    return blk


def _lrn_spatial(x_nchw, ls, bias, alpha, beta):
    n, c, h, w = x_nchw.shape
    pad = (ls - 1) // 2
    planes = n * c
    xf = x_nchw.reshape(planes, h, w)                 # merge leading dims: free
    blk = _plane_block(planes, 4 * (2 * h * w + (h + 2 * pad) * w))
    kernel = functools.partial(_lrn_spatial_kernel, ls=ls, pad=pad,
                               alpha=float(alpha), beta=float(beta),
                               bias=float(bias))
    y = pl.pallas_call(
        kernel,
        out_shape=jax.ShapeDtypeStruct((planes, h, w), jnp.float32),
        grid=(planes // blk,),
        in_specs=[pl.BlockSpec((blk, h, w), lambda i: (i, 0, 0))],
        out_specs=pl.BlockSpec((blk, h, w), lambda i: (i, 0, 0)),
        scratch_shapes=[pltpu.VMEM((blk, h + 2 * pad, w), jnp.float32)],
        compiler_params=pltpu.CompilerParams(
            dimension_semantics=("parallel",)),
    )(xf)
    return y.reshape(n, c, h, w)


# ----------------------------------------------------------------------------
# ACROSS_CHANNELS = True: window over channels; H*W flattened on the lane dim
# (lane-dense loads/stores), channel halo in a sublane-axis VMEM scratch.
# ----------------------------------------------------------------------------
def _lrn_channel_kernel(x_ref, o_ref, p_ref, *, ls, pad, alpha, beta, bias):
    c = x_ref.shape[1]
    x = x_ref[0]                                      # (C, HW_blk)

    p_ref[...] = jnp.zeros_like(p_ref)
    p_ref[pad:pad + c, :] = x * x

    s = p_ref[0:c, :]
    for dc in range(1, ls):
        s = s + p_ref[dc:dc + c, :]

    div = s * (alpha / float(ls)) + bias              # AvgPool3d divisor = ls
    o_ref[0] = (x * _inv_pow(div, beta)).astype(o_ref.dtype)


def _lrn_across_channels(x_nchw, ls, bias, alpha, beta):
    n, c, h, w = x_nchw.shape
    pad = (ls - 1) // 2
    hw = h * w
    xf = x_nchw.reshape(n, c, hw)                     # merge trailing dims: free
    hw_blk = hw
    for cand in (hw // 2, hw // 4):                   # extra parallel grid steps
        if cand >= 128 and cand % 128 == 0 and hw % cand == 0:
            hw_blk = cand
            break
    kernel = functools.partial(_lrn_channel_kernel, ls=ls, pad=pad,
                               alpha=float(alpha), beta=float(beta),
                               bias=float(bias))
    y = pl.pallas_call(
        kernel,
        out_shape=jax.ShapeDtypeStruct((n, c, hw), jnp.float32),
        grid=(n, hw // hw_blk),
        in_specs=[pl.BlockSpec((1, c, hw_blk), lambda i, j: (i, 0, j))],
        out_specs=pl.BlockSpec((1, c, hw_blk), lambda i, j: (i, 0, j)),
        scratch_shapes=[pltpu.VMEM((c + 2 * pad, hw_blk), jnp.float32)],
        compiler_params=pltpu.CompilerParams(
            dimension_semantics=("parallel", "parallel")),
    )(xf)
    return y.reshape(n, c, h, w)


# ----------------------------------------------------------------------------
# Public module-equivalent forward (input NCHW, PyTorch convention).
# ----------------------------------------------------------------------------
def lrn(x_nchw, *, local_size=1, bias=1.0, alpha=1.0, beta=0.75,
        across_channels=False):
    if local_size % 2 != 1:
        raise ValueError("local_size must be odd (PyTorch LRN only preserves "
                         "the windowed dimension for odd local_size)")
    if bias <= 0.0:
        # Keeps div strictly positive so the rsqrt/log-based power is defined.
        raise ValueError("bias must be > 0")
    x = x_nchw.astype(jnp.float32)
    if across_channels:
        return _lrn_across_channels(x, local_size, bias, alpha, beta)
    return _lrn_spatial(x, local_size, bias, alpha, beta)


# ----------------------------------------------------------------------------
# Pure-JAX reference (mirrors the PyTorch module) for the correctness check.
# ----------------------------------------------------------------------------
def _lrn_reference(x, *, local_size, bias, alpha, beta, across_channels):
    pad = (local_size - 1) // 2
    xsq = x * x
    if across_channels:
        p = jnp.pad(xsq, ((0, 0), (pad, pad), (0, 0), (0, 0)))
        win = sum(p[:, d:d + x.shape[1]] for d in range(local_size))
        div = win / local_size
    else:
        h, w = x.shape[2], x.shape[3]
        p = jnp.pad(xsq, ((0, 0), (0, 0), (pad, pad), (pad, pad)))
        win = sum(p[:, :, dh:dh + h, dw:dw + w]
                  for dh in range(local_size) for dw in range(local_size))
        div = win / (local_size * local_size)
    div = div * alpha + bias
    return x / div ** beta


if __name__ == "__main__":
    x = jax.random.normal(jax.random.PRNGKey(0), (2, 16, 16, 16), jnp.float32)

    # CNN-F uses LRN(local_size=5, bias=2, alpha=1e-4, beta=0.75).
    cfg = dict(local_size=5, bias=2.0, alpha=1e-4, beta=0.75)

    spatial_fn = jax.jit(functools.partial(lrn, across_channels=False, **cfg))
    across_fn = jax.jit(functools.partial(lrn, across_channels=True, **cfg))

    y_sp = jax.block_until_ready(spatial_fn(x))
    y_ch = jax.block_until_ready(across_fn(x))

    r_sp = _lrn_reference(x, across_channels=False, **cfg)
    r_ch = _lrn_reference(x, across_channels=True, **cfg)

    assert y_sp.shape == x.shape and y_ch.shape == x.shape
    assert bool(jnp.all(jnp.isfinite(y_sp))) and bool(jnp.all(jnp.isfinite(y_ch)))
    assert bool(jnp.allclose(y_sp, r_sp, rtol=5e-4, atol=1e-5)), \
        float(jnp.max(jnp.abs(y_sp - r_sp)))
    assert bool(jnp.allclose(y_ch, r_ch, rtol=5e-4, atol=1e-5)), \
        float(jnp.max(jnp.abs(y_ch - r_ch)))
    print("KERNEL_OK")
</pallas_src>

<mosaic_0001>
module attributes {stable_mosaic.version = 11 : i64} {
  func.func @_lrn_spatial_kernel(%arg0: i32, %arg1: memref<8x16x16xf32, #tpu.memory_space<vmem>>, %arg2: memref<8x16x16xf32, #tpu.memory_space<vmem>>, %arg3: memref<8x20x16xf32, #tpu.memory_space<vmem>>) attributes {dimension_semantics = [#tpu.dimension_semantics<parallel>], iteration_bounds = array<i64: 4>, scalar_prefetch = 0 : i64, scratch_operands = 1 : i64, tpu.core_type = #tpu.core_type<tc>, window_params = [{transform_indices = @transform_0, window_bounds = array<i64: 8, 16, 16>}, {transform_indices = @transform_1, window_bounds = array<i64: 8, 16, 16>}]} {
    %c0 = arith.constant 0 : index
    %c0_0 = arith.constant 0 : index
    %c0_1 = arith.constant 0 : index
    %0 = vector.load %arg1[%c0, %c0_0, %c0_1] : memref<8x16x16xf32, #tpu.memory_space<vmem>>, vector<8x16x16xf32>
    %cst = arith.constant 0.000000e+00 : f32
    %1 = vector.broadcast %cst : f32 to vector<8x20x16xf32>
    %c0_2 = arith.constant 0 : index
    %c0_3 = arith.constant 0 : index
    %c0_4 = arith.constant 0 : index
    %2 = vector.load %arg3[%c0_2, %c0_3, %c0_4] : memref<8x20x16xf32, #tpu.memory_space<vmem>>, vector<8x20x16xf32>
    tpu.vector_store %arg3[%c0_2, %c0_3, %c0_4], %1 {strides = array<i32>} : memref<8x20x16xf32, #tpu.memory_space<vmem>>, vector<8x20x16xf32>,
    %3 = arith.mulf %0, %0 : vector<8x16x16xf32>
    %c0_5 = arith.constant 0 : index
    %c2 = arith.constant 2 : index
    %c0_6 = arith.constant 0 : index
    %4 = vector.load %arg3[%c0_5, %c2, %c0_6] : memref<8x20x16xf32, #tpu.memory_space<vmem>>, vector<8x16x16xf32>
    tpu.vector_store %arg3[%c0_5, %c2, %c0_6], %3 {strides = array<i32>} : memref<8x20x16xf32, #tpu.memory_space<vmem>>, vector<8x16x16xf32>,
    %c0_7 = arith.constant 0 : index
    %c0_8 = arith.constant 0 : index
    %c0_9 = arith.constant 0 : index
    %5 = vector.load %arg3[%c0_7, %c0_8, %c0_9] : memref<8x20x16xf32, #tpu.memory_space<vmem>>, vector<8x16x16xf32>
    %c0_10 = arith.constant 0 : index
    %c1 = arith.constant 1 : index
    %c0_11 = arith.constant 0 : index
    %6 = vector.load %arg3[%c0_10, %c1, %c0_11] : memref<8x20x16xf32, #tpu.memory_space<vmem>>, vector<8x16x16xf32>
    %7 = arith.addf %5, %6 : vector<8x16x16xf32>
    %c0_12 = arith.constant 0 : index
    %c2_13 = arith.constant 2 : index
    %c0_14 = arith.constant 0 : index
    %8 = vector.load %arg3[%c0_12, %c2_13, %c0_14] : memref<8x20x16xf32, #tpu.memory_space<vmem>>, vector<8x16x16xf32>
    %9 = arith.addf %7, %8 : vector<8x16x16xf32>
    %c0_15 = arith.constant 0 : index
    %c3 = arith.constant 3 : index
    %c0_16 = arith.constant 0 : index
    %10 = vector.load %arg3[%c0_15, %c3, %c0_16] : memref<8x20x16xf32, #tpu.memory_space<vmem>>, vector<8x16x16xf32>
    %11 = arith.addf %9, %10 : vector<8x16x16xf32>
    %c0_17 = arith.constant 0 : index
    %c4 = arith.constant 4 : index
    %c0_18 = arith.constant 0 : index
    %12 = vector.load %arg3[%c0_17, %c4, %c0_18] : memref<8x20x16xf32, #tpu.memory_space<vmem>>, vector<8x16x16xf32>
    %13 = arith.addf %11, %12 : vector<8x16x16xf32>
    %14 = tpu.iota {dimensions = array<i32: 2>} : vector<8x16x16xi32>
    %c15_i32 = arith.constant 15 : i32
    %15 = vector.broadcast %c15_i32 : i32 to vector<8x16x16xi32>
    %16 = arith.cmpi slt, %14, %15 : vector<8x16x16xi32>
    %c15_i32_19 = arith.constant 15 : i32
    %17 = tpu.dynamic_rotate %13 by %c15_i32_19 dim 2 : vector<8x16x16xf32>, i32 -> vector<8x16x16xf32>
    %cst_20 = arith.constant 0.000000e+00 : f32
    %18 = vector.broadcast %cst_20 : f32 to vector<8x16x16xf32>
    %19 = arith.select %16, %17, %18 : vector<8x16x16xi1>, vector<8x16x16xf32>
    %20 = arith.addf %13, %19 : vector<8x16x16xf32>
    %c1_i32 = arith.constant 1 : i32
    %21 = vector.broadcast %c1_i32 : i32 to vector<8x16x16xi32>
    %22 = arith.cmpi sge, %14, %21 : vector<8x16x16xi32>
    %c1_i32_21 = arith.constant 1 : i32
    %23 = tpu.dynamic_rotate %13 by %c1_i32_21 dim 2 : vector<8x16x16xf32>, i32 -> vector<8x16x16xf32>
    %cst_22 = arith.constant 0.000000e+00 : f32
    %24 = vector.broadcast %cst_22 : f32 to vector<8x16x16xf32>
    %25 = arith.select %22, %23, %24 : vector<8x16x16xi1>, vector<8x16x16xf32>
    %26 = arith.addf %20, %25 : vector<8x16x16xf32>
    %c14_i32 = arith.constant 14 : i32
    %27 = vector.broadcast %c14_i32 : i32 to vector<8x16x16xi32>
    %28 = arith.cmpi slt, %14, %27 : vector<8x16x16xi32>
    %c14_i32_23 = arith.constant 14 : i32
    %29 = tpu.dynamic_rotate %13 by %c14_i32_23 dim 2 : vector<8x16x16xf32>, i32 -> vector<8x16x16xf32>
    %cst_24 = arith.constant 0.000000e+00 : f32
    %30 = vector.broadcast %cst_24 : f32 to vector<8x16x16xf32>
    %31 = arith.select %28, %29, %30 : vector<8x16x16xi1>, vector<8x16x16xf32>
    %32 = arith.addf %26, %31 : vector<8x16x16xf32>
    %c2_i32 = arith.constant 2 : i32
    %33 = vector.broadcast %c2_i32 : i32 to vector<8x16x16xi32>
    %34 = arith.cmpi sge, %14, %33 : vector<8x16x16xi32>
    %c2_i32_25 = arith.constant 2 : i32
    %35 = tpu.dynamic_rotate %13 by %c2_i32_25 dim 2 : vector<8x16x16xf32>, i32 -> vector<8x16x16xf32>
    %cst_26 = arith.constant 0.000000e+00 : f32
    %36 = vector.broadcast %cst_26 : f32 to vector<8x16x16xf32>
    %37 = arith.select %34, %35, %36 : vector<8x16x16xi1>, vector<8x16x16xf32>
    %38 = arith.addf %32, %37 : vector<8x16x16xf32>
    %cst_27 = arith.constant 4.000000e-06 : f32
    %39 = vector.broadcast %cst_27 : f32 to vector<8x16x16xf32>
    %40 = arith.mulf %38, %39 : vector<8x16x16xf32>
    %cst_28 = arith.constant 2.000000e+00 : f32
    %41 = vector.broadcast %cst_28 : f32 to vector<8x16x16xf32>
    %42 = arith.addf %40, %41 : vector<8x16x16xf32>
    %43 = math.rsqrt %42 : vector<8x16x16xf32>
    %44 = math.sqrt %42 : vector<8x16x16xf32>
    %45 = math.rsqrt %44 : vector<8x16x16xf32>
    %46 = arith.mulf %43, %45 : vector<8x16x16xf32>
    %47 = arith.mulf %0, %46 : vector<8x16x16xf32>
    %c0_29 = arith.constant 0 : index
    %c0_30 = arith.constant 0 : index
    %c0_31 = arith.constant 0 : index
    %48 = vector.load %arg2[%c0_29, %c0_30, %c0_31] : memref<8x16x16xf32, #tpu.memory_space<vmem>>, vector<8x16x16xf32>
    tpu.vector_store %arg2[%c0_29, %c0_30, %c0_31], %47 {strides = array<i32>} : memref<8x16x16xf32, #tpu.memory_space<vmem>>, vector<8x16x16xf32>,
    return
  }
  func.func @transform_0(%arg0: i32) -> (i32, i32, i32) {
    %c0_i32 = arith.constant 0 : i32
    %c0_i32_0 = arith.constant 0 : i32
    %c0_i32_1 = arith.constant 0 : i32
    return %arg0, %c0_i32, %c0_i32_0 : i32, i32, i32
  }
  func.func @transform_1(%arg0: i32) -> (i32, i32, i32) {
    %c0_i32 = arith.constant 0 : i32
    %c0_i32_0 = arith.constant 0 : i32
    %c0_i32_1 = arith.constant 0 : i32
    return %arg0, %c0_i32, %c0_i32_0 : i32, i32, i32
  }
}

</mosaic_0001>

<llo_original>
// kernel: lrn.1
$region0: #{lrn.1}
  #allocation0 [shape = 'u32[]', space=smem, size = 0x4, offset = 0x4, fixed_abs, tag = 'smem constant byte address 0x4 - core index']
  #allocation1 [shape = 'u32[144,128]{1,0:T(1,128)}', space=vmem, size = 0x12000, scoped, tag = 'internal scratch']
  #allocation2 [shape = 'f32[8,20,16]{2,1,0:T(8,128)}', space=vmem, size = 0x18000, scoped, tag = 'scratch operand']
  %s0 = inlined_call_operand.hbm [shape: f32[32,16,16], index: 0, kind: input, shape index: {}]
  %s1 = inlined_call_operand.hbm [shape: f32[32,16,16], index: 1, kind: output, shape index: {}]
  %s2 = sld [smem:[#allocation0]]
  $region41: #{lrn.1} parent=0
    _
  %s4 = ssub.s32 1, %s2
  %s5 = scalar_select 0, %s4, %s2
  $region1: #{lrn.1} parent=0
    #allocation3 [shape = 'u8[131072]{0}', space=vmem, size = 0x20000, scoped, tag = 'input window, operand 0']
    #allocation4 [shape = 's32[2]{0}', space=sflag, size = 0x8, scoped, tag = 'scoped memory for lrn.1']
    #allocation5 [shape = 's32[2]{0}', space=sflag, size = 0x8, scoped, tag = 'scoped memory for lrn.1']
    #allocation6 [shape = 'u8[131072]{0}', space=vmem, size = 0x20000, scoped, tag = 'output window, operand 0']
    %6 = vsyncpa [#allocation4], 0
    %s7 = scalar_lea.sflag [#allocation4], 1
    %8 = vsyncpa %s7, 0
    %9 = vsyncpa [#allocation5], 0
    %s10 = scalar_lea.sflag [#allocation5], 1
    %11 = vsyncpa %s10, 0
    loop: start=0, step=1, limit=6
    $region2: #{lrn.1} parent=1 // loop_pre_header
      _
    $region3: #{lrn.1} parent=1 // loop_header
      %s13 = sphi 0, %s17
      %p14 = scmp.ge.s32.totalorder %s13, 6
      %s23 = sphi 0, %s25
      %s26 = sphi 0, %s23
      %s27 = sphi 0, %s26
      %s43 = sphi 0, %s27
      %s49 = sphi 0, %s51
      %s52 = sphi 0, %s49
      %s53 = sphi 0, %s52
      %s69 = sphi 0, %s53
    $region4: #{lrn.1} parent=1 // loop_header_branch
      %16 = sbr.rel (%p14) target = $region8
    $region5: #{lrn.1} parent=1 // loop_body
      %s18 = ssub.s32 %s13, 1
      %s19 = ssub.s32 %s13, 2
      %s20 = sadd.s32 %s13, 1
      %s21 = ssub.s32 %s13, %s20
      %p22 = scmp.eq.s32.totalorder %s21, 0
      %s24 = sadd.s32 %s23, 1
      %s25 = scalar_select %p22, %s23, %s24
      %p28 = pneg %p22
      %p29 = scmp.eq.s32.totalorder %s13, 3
      %p30 = por %p28, %p29
      %p31 = scmp.ne.s32.totalorder %s23, %s26
      %p32 = scmp.eq.s32.totalorder %s13, 0
      %p33 = por %p31, %p32
      %p34 = scmp.ne.s32.totalorder %s23, %s26
      %p35 = scmp.eq.s32.totalorder %s18, 3
      %p36 = por %p34, %p35
      %p37 = scmp.ne.s32.totalorder %s26, %s27
      %p38 = scmp.eq.s32.totalorder %s18, 0
      %p39 = por %p37, %p38
      %p40 = scmp.ne.s32.totalorder %s26, %s27
      %p41 = scmp.eq.s32.totalorder %s19, 3
      %p42 = por %p40, %p41
      %p44 = scmp.ne.s32.totalorder %s27, %s43
      %p45 = scmp.eq.s32.totalorder %s19, 0
      %p46 = por %p44, %p45
      %s47 = ssub.s32 %s13, %s20
      %p48 = scmp.eq.s32.totalorder %s47, 0
      %s50 = sadd.s32 %s49, 1
      %s51 = scalar_select %p48, %s49, %s50
      %p54 = pneg %p48
      %p55 = scmp.eq.s32.totalorder %s13, 3
      %p56 = por %p54, %p55
      %p57 = scmp.ne.s32.totalorder %s49, %s52
      %p58 = scmp.eq.s32.totalorder %s13, 0
      %p59 = por %p57, %p58
      %p60 = scmp.ne.s32.totalorder %s49, %s52
      %p61 = scmp.eq.s32.totalorder %s18, 3
      %p62 = por %p60, %p61
      %p63 = scmp.ne.s32.totalorder %s52, %s53
      %p64 = scmp.eq.s32.totalorder %s18, 0
      %p65 = por %p63, %p64
      %p66 = scmp.ne.s32.totalorder %s52, %s53
      %p67 = scmp.eq.s32.totalorder %s19, 3
      %p68 = por %p66, %p67
      %p70 = scmp.ne.s32.totalorder %s53, %s69
      %p71 = scmp.eq.s32.totalorder %s19, 0
      %p72 = por %p70, %p71
      %p73 = scmp.le.s32.totalorder 1, %s13
      %p74 = scmp.lt.s32.totalorder %s13, 5
      %p75 = pnand %p73, %p74
      %p76 = pneg %p75
      // Predicated region
      $region9: #{lrn.1} parent=5 // pred_check
        _
      $region10: #{lrn.1} parent=5 // pred_check_branch
        %78 = sbr.rel (%p75) target = $region12
      $region11: #{lrn.1} parent=5 // pred_region
        %s79 = ssub.s32 %s13, 1
      $region12: #{lrn.1} parent=5 // pred_fallthru
        _
      %p80 = scmp.lt.s32.totalorder %s13, 4
      // Predicated region
      $region13: #{lrn.1} parent=5 // pred_check
        %p81 = pneg %p80
      $region14: #{lrn.1} parent=5 // pred_check_branch
        %83 = sbr.rel (%p81) target = $region16
      $region15: #{lrn.1} parent=5 // pred_region
        // Predicated region
        $region17: #{lrn.1} parent=15 // pred_check
          %p84 = pneg %p33
        $region18: #{lrn.1} parent=15 // pred_check_branch
          %86 = sbr.rel (%p84) target = $region20
        $region19: #{lrn.1} parent=15 // pred_region
          %s87 = sand.u32 %s23, 1
          %s88 = scalar_lea.sflag [#allocation4], %s87
          %s89 = sand.u32 %s23, 1
          %s90 = smul.addr %s89, 128
          %s91 = scalar_lea.vmem [#allocation3], %s90
          %s92 = smul.u32 8, %s13
          %s94 = ssub.s32 2048, 2048
          %95 = vsyncadd %s88, %s94
          %s96 = smul.addr %s92, 2
          %s97 = smul.addr %s96, 128
          %s98 = scalar_lea.hbm %s0, %s97
          %s99 = sshll.u32 %s91, 4
          %s100 = int_to_ptr.vmem [resolvable:$true] %s99
          %105 = dma.hbm_to_vmem [thread:$0]  %s98, 2048, %s100, %s88, 128, 128, 8
        $region20: #{lrn.1} parent=15 // pred_fallthru
          _
      $region16: #{lrn.1} parent=5 // pred_fallthru
        _
      %p106 = scmp.le.s32.totalorder 1, %s13
      %p107 = scmp.lt.s32.totalorder %s13, 5
      %p108 = pnand %p106, %p107
      %p109 = pneg %p108
      // Predicated region
      $region21: #{lrn.1} parent=5 // pred_check
        _
      $region22: #{lrn.1} parent=5 // pred_check_branch
        %111 = sbr.rel (%p108) target = $region24
      $region23: #{lrn.1} parent=5 // pred_region
        %s112 = ssub.s32 %s13, 1
        %s113 = sand.u32 %s26, 1
        %s114 = scalar_lea.sflag [#allocation4], %s113
        %s115 = sand.u32 %s26, 1
        %s116 = smul.addr %s115, 128
        %s117 = scalar_lea.vmem [#allocation3], %s116
        // Predicated region
        $region25: #{lrn.1} parent=23 // pred_check
          %p118 = pneg %p39
        $region26: #{lrn.1} parent=23 // pred_check_branch
          %120 = sbr.rel (%p118) target = $region28
        $region27: #{lrn.1} parent=23 // pred_region
          %121 = dma.done %s114, 2048
        $region28: #{lrn.1} parent=23 // pred_fallthru
          _
        %s122 = sand.u32 %s26, 1
        %s123 = scalar_lea.sflag [#allocation4], %s122
        %s124 = sand.u32 %s26, 1
        %s125 = smul.addr %s124, 128
        %s126 = scalar_lea.vmem [#allocation3], %s125
        %p127 = pneg %p39
        %p128 = pneg %p36
        %p129 = pneg %p65
        %p130 = pneg %p62
        %s131 = sand.u32 %s52, 1
        %s132 = scalar_lea.sflag [#allocation5], %s131
        %s133 = sand.u32 %s52, 1
        %s134 = smul.addr %s133, 128
        %s135 = scalar_lea.vmem [#allocation6], %s134
        %s136 = smul.u32 8, %s18
        %s137 = smul.u32 8, %s18
        %v138 = vld [vmem:[%s117] sm:$0xff]
        %v139 = vld [vmem:[%s117 + $0x8] sm:$0xff]
        %v140 = vld [vmem:[%s117 + $0x10] sm:$0xff]
        %v141 = vld [vmem:[%s117 + $0x18] sm:$0xff]
        %v142 = vld [vmem:[%s117 + $0x20] sm:$0xff]
        %v143 = vld [vmem:[%s117 + $0x28] sm:$0xff]
        %v144 = vld [vmem:[%s117 + $0x30] sm:$0xff]
        %v145 = vld [vmem:[%s117 + $0x38] sm:$0xff]
        %v146 = vld [vmem:[%s117 + $0x40] sm:$0xff]
        %v147 = vld [vmem:[%s117 + $0x48] sm:$0xff]
        %v148 = vld [vmem:[%s117 + $0x50] sm:$0xff]
        %v149 = vld [vmem:[%s117 + $0x58] sm:$0xff]
        %v150 = vld [vmem:[%s117 + $0x60] sm:$0xff]
        %v151 = vld [vmem:[%s117 + $0x68] sm:$0xff]
        %v152 = vld [vmem:[%s117 + $0x70] sm:$0xff]
        %v153 = vld [vmem:[%s117 + $0x78] sm:$0xff]
        %vm154 = vcmask 130048
        %155 = vst.msk [vmem:[#allocation2] sm:$0xff] %vm154, 0.0
        %156 = vst.msk [vmem:[#allocation2 + $0x8] sm:$0xff] %vm154, 0.0
        %vm157 = vcmask 125952
        %158 = vst.msk [vmem:[#allocation2 + $0x10] sm:$0xf] %vm157, 0.0
        %159 = vst.msk [vmem:[#allocation2 + $0x18] sm:$0xff] %vm154, 0.0
        %160 = vst.msk [vmem:[#allocation2 + $0x20] sm:$0xff] %vm154, 0.0
        %161 = vst.msk [vmem:[#allocation2 + $0x28] sm:$0xf] %vm157, 0.0
        %162 = vst.msk [vmem:[#allocation2 + $0x30] sm:$0xff] %vm154, 0.0
        %163 = vst.msk [vmem:[#allocation2 + $0x38] sm:$0xff] %vm154, 0.0
        %164 = vst.msk [vmem:[#allocation2 + $0x40] sm:$0xf] %vm157, 0.0
        %165 = vst.msk [vmem:[#allocation2 + $0x48] sm:$0xff] %vm154, 0.0
        %166 = vst.msk [vmem:[#allocation2 + $0x50] sm:$0xff] %vm154, 0.0
        %167 = vst.msk [vmem:[#allocation2 + $0x58] sm:$0xf] %vm157, 0.0
        %168 = vst.msk [vmem:[#allocation2 + $0x60] sm:$0xff] %vm154, 0.0
        %169 = vst.msk [vmem:[#allocation2 + $0x68] sm:$0xff] %vm154, 0.0
        %170 = vst.msk [vmem:[#allocation2 + $0x70] sm:$0xf] %vm157, 0.0
        %171 = vst.msk [vmem:[#allocation2 + $0x78] sm:$0xff] %vm154, 0.0
        %172 = vst.msk [vmem:[#allocation2 + $0x80] sm:$0xff] %vm154, 0.0
        %173 = vst.msk [vmem:[#allocation2 + $0x88] sm:$0xf] %vm157, 0.0
        %174 = vst.msk [vmem:[#allocation2 + $0x90] sm:$0xff] %vm154, 0.0
        %175 = vst.msk [vmem:[#allocation2 + $0x98] sm:$0xff] %vm154, 0.0
        %176 = vst.msk [vmem:[#allocation2 + $0xa0] sm:$0xf] %vm157, 0.0
        %177 = vst.msk [vmem:[#allocation2 + $0xa8] sm:$0xff] %vm154, 0.0
        %178 = vst.msk [vmem:[#allocation2 + $0xb0] sm:$0xff] %vm154, 0.0
        %179 = vst.msk [vmem:[#allocation2 + $0xb8] sm:$0xf] %vm157, 0.0
        %v180 = vmul.f32 %v138, %v138
        %v181 = vmul.f32 %v139, %v139
        %v182 = vmul.f32 %v140, %v140
        %v183 = vmul.f32 %v141, %v141
        %v184 = vmul.f32 %v142, %v142
        %v185 = vmul.f32 %v143, %v143
        %v186 = vmul.f32 %v144, %v144
        %v187 = vmul.f32 %v145, %v145
        %v188 = vmul.f32 %v146, %v146
        %v189 = vmul.f32 %v147, %v147
        %v190 = vmul.f32 %v148, %v148
        %v191 = vmul.f32 %v149, %v149
        %v192 = vmul.f32 %v150, %v150
        %v193 = vmul.f32 %v151, %v151
        %v194 = vmul.f32 %v152, %v152
        %v195 = vmul.f32 %v153, %v153
        %196 = vst.msk [vmem:[#allocation2 + $0x2] sm:$0xff] %vm154, %v180
        %197 = vst.msk [vmem:[#allocation2 + $0xa] sm:$0xff] %vm154, %v181
        %198 = vst.msk [vmem:[#allocation2 + $0x1a] sm:$0xff] %vm154, %v182
        %199 = vst.msk [vmem:[#allocation2 + $0x22] sm:$0xff] %vm154, %v183
        %200 = vst.msk [vmem:[#allocation2 + $0x32] sm:$0xff] %vm154, %v184
        %201 = vst.msk [vmem:[#allocation2 + $0x3a] sm:$0xff] %vm154, %v185
        %202 = vst.msk [vmem:[#allocation2 + $0x4a] sm:$0xff] %vm154, %v186
        %203 = vst.msk [vmem:[#allocation2 + $0x52] sm:$0xff] %vm154, %v187
        %204 = vst.msk [vmem:[#allocation2 + $0x62] sm:$0xff] %vm154, %v188
        %205 = vst.msk [vmem:[#allocation2 + $0x6a] sm:$0xff] %vm154, %v189
        %206 = vst.msk [vmem:[#allocation2 + $0x7a] sm:$0xff] %vm154, %v190
        %207 = vst.msk [vmem:[#allocation2 + $0x82] sm:$0xff] %vm154, %v191
        %208 = vst.msk [vmem:[#allocation2 + $0x92] sm:$0xff] %vm154, %v192
        %209 = vst.msk [vmem:[#allocation2 + $0x9a] sm:$0xff] %vm154, %v193
        %210 = vst.msk [vmem:[#allocation2 + $0xaa] sm:$0xff] %vm154, %v194
        %211 = vst.msk [vmem:[#allocation2 + $0xb2] sm:$0xff] %vm154, %v195
        %v212 = vld [vmem:[#allocation2] sm:$0xff]
        %v213 = vld [vmem:[#allocation2 + $0x8] sm:$0xff]
        %v214 = vld [vmem:[#allocation2 + $0x18] sm:$0xff]
        %v215 = vld [vmem:[#allocation2 + $0x20] sm:$0xff]
        %v216 = vld [vmem:[#allocation2 + $0x30] sm:$0xff]
        %v217 = vld [vmem:[#allocation2 + $0x38] sm:$0xff]
        %v218 = vld [vmem:[#allocation2 + $0x48] sm:$0xff]
        %v219 = vld [vmem:[#allocation2 + $0x50] sm:$0xff]
        %v220 = vld [vmem:[#allocation2 + $0x60] sm:$0xff]
        %v221 = vld [vmem:[#allocation2 + $0x68] sm:$0xff]
        %v222 = vld [vmem:[#allocation2 + $0x78] sm:$0xff]
        %v223 = vld [vmem:[#allocation2 + $0x80] sm:$0xff]
        %v224 = vld [vmem:[#allocation2 + $0x90] sm:$0xff]
        %v225 = vld [vmem:[#allocation2 + $0x98] sm:$0xff]
        %v226 = vld [vmem:[#allocation2 + $0xa8] sm:$0xff]
        %v227 = vld [vmem:[#allocation2 + $0xb0] sm:$0xff]
        %v228 = vld [vmem:[#allocation2 + $0x1] sm:$0xff]
        %v229 = vld [vmem:[#allocation2 + $0x9] sm:$0xff]
        %v230 = vld [vmem:[#allocation2 + $0x19] sm:$0xff]
        %v231 = vld [vmem:[#allocation2 + $0x21] sm:$0xff]
        %v232 = vld [vmem:[#allocation2 + $0x31] sm:$0xff]
        %v233 = vld [vmem:[#allocation2 + $0x39] sm:$0xff]
        %v234 = vld [vmem:[#allocation2 + $0x49] sm:$0xff]
        %v235 = vld [vmem:[#allocation2 + $0x51] sm:$0xff]
        %v236 = vld [vmem:[#allocation2 + $0x61] sm:$0xff]
        %v237 = vld [vmem:[#allocation2 + $0x69] sm:$0xff]
        %v238 = vld [vmem:[#allocation2 + $0x79] sm:$0xff]
        %v239 = vld [vmem:[#allocation2 + $0x81] sm:$0xff]
        %v240 = vld [vmem:[#allocation2 + $0x91] sm:$0xff]
        %v241 = vld [vmem:[#allocation2 + $0x99] sm:$0xff]
        %v242 = vld [vmem:[#allocation2 + $0xa9] sm:$0xff]
        %v243 = vld [vmem:[#allocation2 + $0xb1] sm:$0xff]
        %v244 = vadd.f32 %v212, %v228
        %v245 = vadd.f32 %v213, %v229
        %v246 = vadd.f32 %v214, %v230
        %v247 = vadd.f32 %v215, %v231
        %v248 = vadd.f32 %v216, %v232
        %v249 = vadd.f32 %v217, %v233
        %v250 = vadd.f32 %v218, %v234
        %v251 = vadd.f32 %v219, %v235
        %v252 = vadd.f32 %v220, %v236
        %v253 = vadd.f32 %v221, %v237
        %v254 = vadd.f32 %v222, %v238
        %v255 = vadd.f32 %v223, %v239
        %v256 = vadd.f32 %v224, %v240
        %v257 = vadd.f32 %v225, %v241
        %v258 = vadd.f32 %v226, %v242
        %v259 = vadd.f32 %v227, %v243
        %v260 = vld [vmem:[#allocation2 + $0x2] sm:$0xff]
        %v261 = vld [vmem:[#allocation2 + $0xa] sm:$0xff]
        %v262 = vld [vmem:[#allocation2 + $0x1a] sm:$0xff]
        %v263 = vld [vmem:[#allocation2 + $0x22] sm:$0xff]
        %v264 = vld [vmem:[#allocation2 + $0x32] sm:$0xff]
        %v265 = vld [vmem:[#allocation2 + $0x3a] sm:$0xff]
        %v266 = vld [vmem:[#allocation2 + $0x4a] sm:$0xff]
        %v267 = vld [vmem:[#allocation2 + $0x52] sm:$0xff]
        %v268 = vld [vmem:[#allocation2 + $0x62] sm:$0xff]
        %v269 = vld [vmem:[#allocation2 + $0x6a] sm:$0xff]
        %v270 = vld [vmem:[#allocation2 + $0x7a] sm:$0xff]
        %v271 = vld [vmem:[#allocation2 + $0x82] sm:$0xff]
        %v272 = vld [vmem:[#allocation2 + $0x92] sm:$0xff]
        %v273 = vld [vmem:[#allocation2 + $0x9a] sm:$0xff]
        %v274 = vld [vmem:[#allocation2 + $0xaa] sm:$0xff]
        %v275 = vld [vmem:[#allocation2 + $0xb2] sm:$0xff]
        %v276 = vadd.f32 %v244, %v260
        %v277 = vadd.f32 %v245, %v261
        %v278 = vadd.f32 %v246, %v262
        %v279 = vadd.f32 %v247, %v263
        %v280 = vadd.f32 %v248, %v264
        %v281 = vadd.f32 %v249, %v265
        %v282 = vadd.f32 %v250, %v266
        %v283 = vadd.f32 %v251, %v267
        %v284 = vadd.f32 %v252, %v268
        %v285 = vadd.f32 %v253, %v269
        %v286 = vadd.f32 %v254, %v270
        %v287 = vadd.f32 %v255, %v271
        %v288 = vadd.f32 %v256, %v272
        %v289 = vadd.f32 %v257, %v273
        %v290 = vadd.f32 %v258, %v274
        %v291 = vadd.f32 %v259, %v275
        %v292 = vld [vmem:[#allocation2 + $0x3] sm:$0xff]
        %v293 = vld [vmem:[#allocation2 + $0xb] sm:$0xff]
        %v294 = vld [vmem:[#allocation2 + $0x1b] sm:$0xff]
        %v295 = vld [vmem:[#allocation2 + $0x23] sm:$0xff]
        %v296 = vld [vmem:[#allocation2 + $0x33] sm:$0xff]
        %v297 = vld [vmem:[#allocation2 + $0x3b] sm:$0xff]
        %v298 = vld [vmem:[#allocation2 + $0x4b] sm:$0xff]
        %v299 = vld [vmem:[#allocation2 + $0x53] sm:$0xff]
        %v300 = vld [vmem:[#allocation2 + $0x63] sm:$0xff]
        %v301 = vld [vmem:[#allocation2 + $0x6b] sm:$0xff]
        %v302 = vld [vmem:[#allocation2 + $0x7b] sm:$0xff]
        %v303 = vld [vmem:[#allocation2 + $0x83] sm:$0xff]
        %v304 = vld [vmem:[#allocation2 + $0x93] sm:$0xff]
        %v305 = vld [vmem:[#allocation2 + $0x9b] sm:$0xff]
        %v306 = vld [vmem:[#allocation2 + $0xab] sm:$0xff]
        %v307 = vld [vmem:[#allocation2 + $0xb3] sm:$0xff]
        %v308 = vadd.f32 %v276, %v292
        %v309 = vadd.f32 %v277, %v293
        %v310 = vadd.f32 %v278, %v294
        %v311 = vadd.f32 %v279, %v295
        %v312 = vadd.f32 %v280, %v296
        %v313 = vadd.f32 %v281, %v297
        %v314 = vadd.f32 %v282, %v298
        %v315 = vadd.f32 %v283, %v299
        %v316 = vadd.f32 %v284, %v300
        %v317 = vadd.f32 %v285, %v301
        %v318 = vadd.f32 %v286, %v302
        %v319 = vadd.f32 %v287, %v303
        %v320 = vadd.f32 %v288, %v304
        %v321 = vadd.f32 %v289, %v305
        %v322 = vadd.f32 %v290, %v306
        %v323 = vadd.f32 %v291, %v307
        %v324 = vld [vmem:[#allocation2 + $0x4] sm:$0xff]
        %v325 = vld [vmem:[#allocation2 + $0xc] sm:$0xff]
        %v326 = vld [vmem:[#allocation2 + $0x1c] sm:$0xff]
        %v327 = vld [vmem:[#allocation2 + $0x24] sm:$0xff]
        %v328 = vld [vmem:[#allocation2 + $0x34] sm:$0xff]
        %v329 = vld [vmem:[#allocation2 + $0x3c] sm:$0xff]
        %v330 = vld [vmem:[#allocation2 + $0x4c] sm:$0xff]
        %v331 = vld [vmem:[#allocation2 + $0x54] sm:$0xff]
        %v332 = vld [vmem:[#allocation2 + $0x64] sm:$0xff]
        %v333 = vld [vmem:[#allocation2 + $0x6c] sm:$0xff]
        %v334 = vld [vmem:[#allocation2 + $0x7c] sm:$0xff]
        %v335 = vld [vmem:[#allocation2 + $0x84] sm:$0xff]
        %v336 = vld [vmem:[#allocation2 + $0x94] sm:$0xff]
        %v337 = vld [vmem:[#allocation2 + $0x9c] sm:$0xff]
        %v338 = vld [vmem:[#allocation2 + $0xac] sm:$0xff]
        %v339 = vld [vmem:[#allocation2 + $0xb4] sm:$0xff]
        %v340 = vadd.f32 %v308, %v324
        %v341 = vadd.f32 %v309, %v325
        %v342 = vadd.f32 %v310, %v326
        %v343 = vadd.f32 %v311, %v327
        %v344 = vadd.f32 %v312, %v328
        %v345 = vadd.f32 %v313, %v329
        %v346 = vadd.f32 %v314, %v330
        %v347 = vadd.f32 %v315, %v331
        %v348 = vadd.f32 %v316, %v332
        %v349 = vadd.f32 %v317, %v333
        %v350 = vadd.f32 %v318, %v334
        %v351 = vadd.f32 %v319, %v335
        %v352 = vadd.f32 %v320, %v336
        %v353 = vadd.f32 %v321, %v337
        %v354 = vadd.f32 %v322, %v338
        %v355 = vadd.f32 %v323, %v339
        %v356 = vlaneseq
        %v357 = vand.u32 %v356, 127
        %vm358 = vcmp.lt.s32.totalorder %v357, 15
        %vm359 = vcmask 1047680
        %360 = vrot.lane.b32.xlu0 %v340, 16
        %v361 = vpop.permute.xlu0 %360
        %v362 = vsel %vm359, %v361, %v340
        %363 = vrot.lane.b32.xlu0 %v341, 16
        %v364 = vpop.permute.xlu0 %363
        %v365 = vsel %vm359, %v364, %v341
        %366 = vrot.lane.b32.xlu0 %v342, 16
        %v367 = vpop.permute.xlu0 %366
        %v368 = vsel %vm359, %v367, %v342
        %369 = vrot.lane.b32.xlu0 %v343, 16
        %v370 = vpop.permute.xlu0 %369
        %v371 = vsel %vm359, %v370, %v343
        %372 = vrot.lane.b32.xlu0 %v344, 16
        %v373 = vpop.permute.xlu0 %372
        %v374 = vsel %vm359, %v373, %v344
        %375 = vrot.lane.b32.xlu0 %v345, 16
        %v376 = vpop.permute.xlu0 %375
        %v377 = vsel %vm359, %v376, %v345
        %378 = vrot.lane.b32.xlu0 %v346, 16
        %v379 = vpop.permute.xlu0 %378
        %v380 = vsel %vm359, %v379, %v346
        %381 = vrot.lane.b32.xlu0 %v347, 16
        %v382 = vpop.permute.xlu0 %381
        %v383 = vsel %vm359, %v382, %v347
        %384 = vrot.lane.b32.xlu0 %v348, 16
        %v385 = vpop.permute.xlu0 %384
        %v386 = vsel %vm359, %v385, %v348
        %387 = vrot.lane.b32.xlu0 %v349, 16
        %v388 = vpop.permute.xlu0 %387
        %v389 = vsel %vm359, %v388, %v349
        %390 = vrot.lane.b32.xlu0 %v350, 16
        %v391 = vpop.permute.xlu0 %390
        %v392 = vsel %vm359, %v391, %v350
        %393 = vrot.lane.b32.xlu0 %v351, 16
        %v394 = vpop.permute.xlu0 %393
        %v395 = vsel %vm359, %v394, %v351
        %396 = vrot.lane.b32.xlu0 %v352, 16
        %v397 = vpop.permute.xlu0 %396
        %v398 = vsel %vm359, %v397, %v352
        %399 = vrot.lane.b32.xlu0 %v353, 16
        %v400 = vpop.permute.xlu0 %399
        %v401 = vsel %vm359, %v400, %v353
        %402 = vrot.lane.b32.xlu0 %v354, 16
        %v403 = vpop.permute.xlu0 %402
        %v404 = vsel %vm359, %v403, %v354
        %405 = vrot.lane.b32.xlu0 %v355, 16
        %v406 = vpop.permute.xlu0 %405
        %v407 = vsel %vm359, %v406, %v355
        %408 = vrot.lane.b32.xlu0 %v362, 16
        %v409 = vpop.permute.xlu0 %408
        %410 = vrot.lane.b32.xlu0 %v365, 16
        %v411 = vpop.permute.xlu0 %410
        %412 = vrot.lane.b32.xlu0 %v368, 16
        %v413 = vpop.permute.xlu0 %412
        %414 = vrot.lane.b32.xlu0 %v371, 16
        %v415 = vpop.permute.xlu0 %414
        %416 = vrot.lane.b32.xlu0 %v374, 16
        %v417 = vpop.permute.xlu0 %416
        %418 = vrot.lane.b32.xlu0 %v377, 16
        %v419 = vpop.permute.xlu0 %418
        %420 = vrot.lane.b32.xlu0 %v380, 16
        %v421 = vpop.permute.xlu0 %420
        %422 = vrot.lane.b32.xlu0 %v383, 16
        %v423 = vpop.permute.xlu0 %422
        %424 = vrot.lane.b32.xlu0 %v386, 16
        %v425 = vpop.permute.xlu0 %424
        %426 = vrot.lane.b32.xlu0 %v389, 16
        %v427 = vpop.permute.xlu0 %426
        %428 = vrot.lane.b32.xlu0 %v392, 16
        %v429 = vpop.permute.xlu0 %428
        %430 = vrot.lane.b32.xlu0 %v395, 16
        %v431 = vpop.permute.xlu0 %430
        %432 = vrot.lane.b32.xlu0 %v398, 16
        %v433 = vpop.permute.xlu0 %432
        %434 = vrot.lane.b32.xlu0 %v401, 16
        %v435 = vpop.permute.xlu0 %434
        %436 = vrot.lane.b32.xlu0 %v404, 16
        %v437 = vpop.permute.xlu0 %436
        %438 = vrot.lane.b32.xlu0 %v407, 16
        %v439 = vpop.permute.xlu0 %438
        %v440 = vsel %vm359, %v409, %v340
        %v441 = vsel %vm359, %v411, %v341
        %v442 = vsel %vm359, %v413, %v342
        %v443 = vsel %vm359, %v415, %v343
        %v444 = vsel %vm359, %v417, %v344
        %v445 = vsel %vm359, %v419, %v345
        %v446 = vsel %vm359, %v421, %v346
        %v447 = vsel %vm359, %v423, %v347
        %v448 = vsel %vm359, %v425, %v348
        %v449 = vsel %vm359, %v427, %v349
        %v450 = vsel %vm359, %v429, %v350
        %v451 = vsel %vm359, %v431, %v351
        %v452 = vsel %vm359, %v433, %v352
        %v453 = vsel %vm359, %v435, %v353
        %v454 = vsel %vm359, %v437, %v354
        %v455 = vsel %vm359, %v439, %v355
        %472 = vrot.lane.b32.xlu0 %v440, 127
        %v473 = vpop.permute.xlu0 %472
        %474 = vrot.lane.b32.xlu0 %v441, 127
        %v475 = vpop.permute.xlu0 %474
        %476 = vrot.lane.b32.xlu0 %v442, 127
        %v477 = vpop.permute.xlu0 %476
        %478 = vrot.lane.b32.xlu0 %v443, 127
        %v479 = vpop.permute.xlu0 %478
        %480 = vrot.lane.b32.xlu0 %v444, 127
        %v481 = vpop.permute.xlu0 %480
        %482 = vrot.lane.b32.xlu0 %v445, 127
        %v483 = vpop.permute.xlu0 %482
        %484 = vrot.lane.b32.xlu0 %v446, 127
        %v485 = vpop.permute.xlu0 %484
        %486 = vrot.lane.b32.xlu0 %v447, 127
        %v487 = vpop.permute.xlu0 %486
        %488 = vrot.lane.b32.xlu0 %v448, 127
        %v489 = vpop.permute.xlu0 %488
        %490 = vrot.lane.b32.xlu0 %v449, 127
        %v491 = vpop.permute.xlu0 %490
        %492 = vrot.lane.b32.xlu0 %v450, 127
        %v493 = vpop.permute.xlu0 %492
        %494 = vrot.lane.b32.xlu0 %v451, 127
        %v495 = vpop.permute.xlu0 %494
        %496 = vrot.lane.b32.xlu0 %v452, 127
        %v497 = vpop.permute.xlu0 %496
        %498 = vrot.lane.b32.xlu0 %v453, 127
        %v499 = vpop.permute.xlu0 %498
        %500 = vrot.lane.b32.xlu0 %v454, 127
        %v501 = vpop.permute.xlu0 %500
        %502 = vrot.lane.b32.xlu0 %v455, 127
        %v503 = vpop.permute.xlu0 %502
        %v520 = vsel %vm358, %v473, 0.0
        %v521 = vsel %vm358, %v475, 0.0
        %v522 = vsel %vm358, %v477, 0.0
        %v523 = vsel %vm358, %v479, 0.0
        %v524 = vsel %vm358, %v481, 0.0
        %v525 = vsel %vm358, %v483, 0.0
        %v526 = vsel %vm358, %v485, 0.0
        %v527 = vsel %vm358, %v487, 0.0
        %v528 = vsel %vm358, %v489, 0.0
        %v529 = vsel %vm358, %v491, 0.0
        %v530 = vsel %vm358, %v493, 0.0
        %v531 = vsel %vm358, %v495, 0.0
        %v532 = vsel %vm358, %v497, 0.0
        %v533 = vsel %vm358, %v499, 0.0
        %v534 = vsel %vm358, %v501, 0.0
        %v535 = vsel %vm358, %v503, 0.0
        %v536 = vadd.f32 %v340, %v520
        %v537 = vadd.f32 %v341, %v521
        %v538 = vadd.f32 %v342, %v522
        %v539 = vadd.f32 %v343, %v523
        %v540 = vadd.f32 %v344, %v524
        %v541 = vadd.f32 %v345, %v525
        %v542 = vadd.f32 %v346, %v526
        %v543 = vadd.f32 %v347, %v527
        %v544 = vadd.f32 %v348, %v528
        %v545 = vadd.f32 %v349, %v529
        %v546 = vadd.f32 %v350, %v530
        %v547 = vadd.f32 %v351, %v531
        %v548 = vadd.f32 %v352, %v532
        %v549 = vadd.f32 %v353, %v533
        %v550 = vadd.f32 %v354, %v534
        %v551 = vadd.f32 %v355, %v535
        %vm552 = vcmp.ge.s32.totalorder %v357, 1
        %553 = vrot.lane.b32.xlu0 %v440, 113
        %v554 = vpop.permute.xlu0 %553
        %555 = vrot.lane.b32.xlu0 %v441, 113
        %v556 = vpop.permute.xlu0 %555
        %557 = vrot.lane.b32.xlu0 %v442, 113
        %v558 = vpop.permute.xlu0 %557
        %559 = vrot.lane.b32.xlu0 %v443, 113
        %v560 = vpop.permute.xlu0 %559
        %561 = vrot.lane.b32.xlu0 %v444, 113
        %v562 = vpop.permute.xlu0 %561
        %563 = vrot.lane.b32.xlu0 %v445, 113
        %v564 = vpop.permute.xlu0 %563
        %565 = vrot.lane.b32.xlu0 %v446, 113
        %v566 = vpop.permute.xlu0 %565
        %567 = vrot.lane.b32.xlu0 %v447, 113
        %v568 = vpop.permute.xlu0 %567
        %569 = vrot.lane.b32.xlu0 %v448, 113
        %v570 = vpop.permute.xlu0 %569
        %571 = vrot.lane.b32.xlu0 %v449, 113
        %v572 = vpop.permute.xlu0 %571
        %573 = vrot.lane.b32.xlu0 %v450, 113
        %v574 = vpop.permute.xlu0 %573
        %575 = vrot.lane.b32.xlu0 %v451, 113
        %v576 = vpop.permute.xlu0 %575
        %577 = vrot.lane.b32.xlu0 %v452, 113
        %v578 = vpop.permute.xlu0 %577
        %579 = vrot.lane.b32.xlu0 %v453, 113
        %v580 = vpop.permute.xlu0 %579
        %581 = vrot.lane.b32.xlu0 %v454, 113
        %v582 = vpop.permute.xlu0 %581
        %583 = vrot.lane.b32.xlu0 %v455, 113
        %v584 = vpop.permute.xlu0 %583
        %v601 = vsel %vm552, %v554, 0.0
        %v602 = vsel %vm552, %v556, 0.0
        %v603 = vsel %vm552, %v558, 0.0
        %v604 = vsel %vm552, %v560, 0.0
        %v605 = vsel %vm552, %v562, 0.0
        %v606 = vsel %vm552, %v564, 0.0
        %v607 = vsel %vm552, %v566, 0.0
        %v608 = vsel %vm552, %v568, 0.0
        %v609 = vsel %vm552, %v570, 0.0
        %v610 = vsel %vm552, %v572, 0.0
        %v611 = vsel %vm552, %v574, 0.0
        %v612 = vsel %vm552, %v576, 0.0
        %v613 = vsel %vm552, %v578, 0.0
        %v614 = vsel %vm552, %v580, 0.0
        %v615 = vsel %vm552, %v582, 0.0
        %v616 = vsel %vm552, %v584, 0.0
        %v617 = vadd.f32 %v536, %v601
        %v618 = vadd.f32 %v537, %v602
        %v619 = vadd.f32 %v538, %v603
        %v620 = vadd.f32 %v539, %v604
        %v621 = vadd.f32 %v540, %v605
        %v622 = vadd.f32 %v541, %v606
        %v623 = vadd.f32 %v542, %v607
        %v624 = vadd.f32 %v543, %v608
        %v625 = vadd.f32 %v544, %v609
        %v626 = vadd.f32 %v545, %v610
        %v627 = vadd.f32 %v546, %v611
        %v628 = vadd.f32 %v547, %v612
        %v629 = vadd.f32 %v548, %v613
        %v630 = vadd.f32 %v549, %v614
        %v631 = vadd.f32 %v550, %v615
        %v632 = vadd.f32 %v551, %v616
        %vm633 = vcmp.lt.s32.totalorder %v357, 14
        %634 = vrot.lane.b32.xlu0 %v440, 126
        %v635 = vpop.permute.xlu0 %634
        %636 = vrot.lane.b32.xlu0 %v441, 126
        %v637 = vpop.permute.xlu0 %636
        %638 = vrot.lane.b32.xlu0 %v442, 126
        %v639 = vpop.permute.xlu0 %638
        %640 = vrot.lane.b32.xlu0 %v443, 126
        %v641 = vpop.permute.xlu0 %640
        %642 = vrot.lane.b32.xlu0 %v444, 126
        %v643 = vpop.permute.xlu0 %642
        %644 = vrot.lane.b32.xlu0 %v445, 126
        %v645 = vpop.permute.xlu0 %644
        %646 = vrot.lane.b32.xlu0 %v446, 126
        %v647 = vpop.permute.xlu0 %646
        %648 = vrot.lane.b32.xlu0 %v447, 126
        %v649 = vpop.permute.xlu0 %648
        %650 = vrot.lane.b32.xlu0 %v448, 126
        %v651 = vpop.permute.xlu0 %650
        %652 = vrot.lane.b32.xlu0 %v449, 126
        %v653 = vpop.permute.xlu0 %652
        %654 = vrot.lane.b32.xlu0 %v450, 126
        %v655 = vpop.permute.xlu0 %654
        %656 = vrot.lane.b32.xlu0 %v451, 126
        %v657 = vpop.permute.xlu0 %656
        %658 = vrot.lane.b32.xlu0 %v452, 126
        %v659 = vpop.permute.xlu0 %658
        %660 = vrot.lane.b32.xlu0 %v453, 126
        %v661 = vpop.permute.xlu0 %660
        %662 = vrot.lane.b32.xlu0 %v454, 126
        %v663 = vpop.permute.xlu0 %662
        %664 = vrot.lane.b32.xlu0 %v455, 126
        %v665 = vpop.permute.xlu0 %664
        %v682 = vsel %vm633, %v635, 0.0
        %v683 = vsel %vm633, %v637, 0.0
        %v684 = vsel %vm633, %v639, 0.0
        %v685 = vsel %vm633, %v641, 0.0
        %v686 = vsel %vm633, %v643, 0.0
        %v687 = vsel %vm633, %v645, 0.0
        %v688 = vsel %vm633, %v647, 0.0
        %v689 = vsel %vm633, %v649, 0.0
        %v690 = vsel %vm633, %v651, 0.0
        %v691 = vsel %vm633, %v653, 0.0
        %v692 = vsel %vm633, %v655, 0.0
        %v693 = vsel %vm633, %v657, 0.0
        %v694 = vsel %vm633, %v659, 0.0
        %v695 = vsel %vm633, %v661, 0.0
        %v696 = vsel %vm633, %v663, 0.0
        %v697 = vsel %vm633, %v665, 0.0
        %v698 = vadd.f32 %v617, %v682
        %v699 = vadd.f32 %v618, %v683
        %v700 = vadd.f32 %v619, %v684
        %v701 = vadd.f32 %v620, %v685
        %v702 = vadd.f32 %v621, %v686
        %v703 = vadd.f32 %v622, %v687
        %v704 = vadd.f32 %v623, %v688
        %v705 = vadd.f32 %v624, %v689
        %v706 = vadd.f32 %v625, %v690
        %v707 = vadd.f32 %v626, %v691
        %v708 = vadd.f32 %v627, %v692
        %v709 = vadd.f32 %v628, %v693
        %v710 = vadd.f32 %v629, %v694
        %v711 = vadd.f32 %v630, %v695
        %v712 = vadd.f32 %v631, %v696
        %v713 = vadd.f32 %v632, %v697
        %vm714 = vcmp.ge.s32.totalorder %v357, 2
        %715 = vrot.lane.b32.xlu0 %v440, 114
        %v716 = vpop.permute.xlu0 %715
        %717 = vrot.lane.b32.xlu0 %v441, 114
        %v718 = vpop.permute.xlu0 %717
        %719 = vrot.lane.b32.xlu0 %v442, 114
        %v720 = vpop.permute.xlu0 %719
        %721 = vrot.lane.b32.xlu0 %v443, 114
        %v722 = vpop.permute.xlu0 %721
        %723 = vrot.lane.b32.xlu0 %v444, 114
        %v724 = vpop.permute.xlu0 %723
        %725 = vrot.lane.b32.xlu0 %v445, 114
        %v726 = vpop.permute.xlu0 %725
        %727 = vrot.lane.b32.xlu0 %v446, 114
        %v728 = vpop.permute.xlu0 %727
        %729 = vrot.lane.b32.xlu0 %v447, 114
        %v730 = vpop.permute.xlu0 %729
        %731 = vrot.lane.b32.xlu0 %v448, 114
        %v732 = vpop.permute.xlu0 %731
        %733 = vrot.lane.b32.xlu0 %v449, 114
        %v734 = vpop.permute.xlu0 %733
        %735 = vrot.lane.b32.xlu0 %v450, 114
        %v736 = vpop.permute.xlu0 %735
        %737 = vrot.lane.b32.xlu0 %v451, 114
        %v738 = vpop.permute.xlu0 %737
        %739 = vrot.lane.b32.xlu0 %v452, 114
        %v740 = vpop.permute.xlu0 %739
        %741 = vrot.lane.b32.xlu0 %v453, 114
        %v742 = vpop.permute.xlu0 %741
        %743 = vrot.lane.b32.xlu0 %v454, 114
        %v744 = vpop.permute.xlu0 %743
        %745 = vrot.lane.b32.xlu0 %v455, 114
        %v746 = vpop.permute.xlu0 %745
        %v763 = vsel %vm714, %v716, 0.0
        %v764 = vsel %vm714, %v718, 0.0
        %v765 = vsel %vm714, %v720, 0.0
        %v766 = vsel %vm714, %v722, 0.0
        %v767 = vsel %vm714, %v724, 0.0
        %v768 = vsel %vm714, %v726, 0.0
        %v769 = vsel %vm714, %v728, 0.0
        %v770 = vsel %vm714, %v730, 0.0
        %v771 = vsel %vm714, %v732, 0.0
        %v772 = vsel %vm714, %v734, 0.0
        %v773 = vsel %vm714, %v736, 0.0
        %v774 = vsel %vm714, %v738, 0.0
        %v775 = vsel %vm714, %v740, 0.0
        %v776 = vsel %vm714, %v742, 0.0
        %v777 = vsel %vm714, %v744, 0.0
        %v778 = vsel %vm714, %v746, 0.0
        %v779 = vadd.f32 %v698, %v763
        %v780 = vadd.f32 %v699, %v764
        %v781 = vadd.f32 %v700, %v765
        %v782 = vadd.f32 %v701, %v766
        %v783 = vadd.f32 %v702, %v767
        %v784 = vadd.f32 %v703, %v768
        %v785 = vadd.f32 %v704, %v769
        %v786 = vadd.f32 %v705, %v770
        %v787 = vadd.f32 %v706, %v771
        %v788 = vadd.f32 %v707, %v772
        %v789 = vadd.f32 %v708, %v773
        %v790 = vadd.f32 %v709, %v774
        %v791 = vadd.f32 %v710, %v775
        %v792 = vadd.f32 %v711, %v776
        %v793 = vadd.f32 %v712, %v777
        %v794 = vadd.f32 %v713, %v778
        %v795 = vmul.f32 %v779, 4e-06
        %v796 = vmul.f32 %v780, 4e-06
        %v797 = vmul.f32 %v781, 4e-06
        %v798 = vmul.f32 %v782, 4e-06
        %v799 = vmul.f32 %v783, 4e-06
        %v800 = vmul.f32 %v784, 4e-06
        %v801 = vmul.f32 %v785, 4e-06
        %v802 = vmul.f32 %v786, 4e-06
        %v803 = vmul.f32 %v787, 4e-06
        %v804 = vmul.f32 %v788, 4e-06
        %v805 = vmul.f32 %v789, 4e-06
        %v806 = vmul.f32 %v790, 4e-06
        %v807 = vmul.f32 %v791, 4e-06
        %v808 = vmul.f32 %v792, 4e-06
        %v809 = vmul.f32 %v793, 4e-06
        %v810 = vmul.f32 %v794, 4e-06
        %v811 = vadd.f32 %v795, 2.0
        %v812 = vadd.f32 %v796, 2.0
        %v813 = vadd.f32 %v797, 2.0
        %v814 = vadd.f32 %v798, 2.0
        %v815 = vadd.f32 %v799, 2.0
        %v816 = vadd.f32 %v800, 2.0
        %v817 = vadd.f32 %v801, 2.0
        %v818 = vadd.f32 %v802, 2.0
        %v819 = vadd.f32 %v803, 2.0
        %v820 = vadd.f32 %v804, 2.0
        %v821 = vadd.f32 %v805, 2.0
        %v822 = vadd.f32 %v806, 2.0
        %v823 = vadd.f32 %v807, 2.0
        %v824 = vadd.f32 %v808, 2.0
        %v825 = vadd.f32 %v809, 2.0
        %v826 = vadd.f32 %v810, 2.0
        %v827 = vrsqrt.pop %v811
        %v828 = vrsqrt.pop %v812
        %v829 = vrsqrt.pop %v813
        %v830 = vrsqrt.pop %v814
        %v831 = vrsqrt.pop %v815
        %v832 = vrsqrt.pop %v816
        %v833 = vrsqrt.pop %v817
        %v834 = vrsqrt.pop %v818
        %v835 = vrsqrt.pop %v819
        %v836 = vrsqrt.pop %v820
        %v837 = vrsqrt.pop %v821
        %v838 = vrsqrt.pop %v822
        %v839 = vrsqrt.pop %v823
        %v840 = vrsqrt.pop %v824
        %v841 = vrsqrt.pop %v825
        %v842 = vrsqrt.pop %v826
        %v843 = vrsqrt.pop %v811
        %v844 = vmul.f32 %v811, %v843
        %vm845 = vcmp.eq.f32.partialorder %v811, inf
        %v846 = vsel %vm845, %v811, %v844
        %vm847 = vcmp.eq.f32.partialorder %v811, 0.0
        %v848 = vand.u32 %v811, 2147483648
        %v849 = vsel %vm847, %v848, %v846
        %v850 = vrsqrt.pop %v812
        %v851 = vmul.f32 %v812, %v850
        %vm852 = vcmp.eq.f32.partialorder %v812, inf
        %v853 = vsel %vm852, %v812, %v851
        %vm854 = vcmp.eq.f32.partialorder %v812, 0.0
        %v855 = vand.u32 %v812, 2147483648
        %v856 = vsel %vm854, %v855, %v853
        %v857 = vrsqrt.pop %v813
        %v858 = vmul.f32 %v813, %v857
        %vm859 = vcmp.eq.f32.partialorder %v813, inf
        %v860 = vsel %vm859, %v813, %v858
        %vm861 = vcmp.eq.f32.partialorder %v813, 0.0
        %v862 = vand.u32 %v813, 2147483648
        %v863 = vsel %vm861, %v862, %v860
        %v864 = vrsqrt.pop %v814
        %v865 = vmul.f32 %v814, %v864
        %vm866 = vcmp.eq.f32.partialorder %v814, inf
        %v867 = vsel %vm866, %v814, %v865
        %vm868 = vcmp.eq.f32.partialorder %v814, 0.0
        %v869 = vand.u32 %v814, 2147483648
        %v870 = vsel %vm868, %v869, %v867
        %v871 = vrsqrt.pop %v815
        %v872 = vmul.f32 %v815, %v871
        %vm873 = vcmp.eq.f32.partialorder %v815, inf
        %v874 = vsel %vm873, %v815, %v872
        %vm875 = vcmp.eq.f32.partialorder %v815, 0.0
        %v876 = vand.u32 %v815, 2147483648
        %v877 = vsel %vm875, %v876, %v874
        %v878 = vrsqrt.pop %v816
        %v879 = vmul.f32 %v816, %v878
        %vm880 = vcmp.eq.f32.partialorder %v816, inf
        %v881 = vsel %vm880, %v816, %v879
        %vm882 = vcmp.eq.f32.partialorder %v816, 0.0
        %v883 = vand.u32 %v816, 2147483648
        %v884 = vsel %vm882, %v883, %v881
        %v885 = vrsqrt.pop %v817
        %v886 = vmul.f32 %v817, %v885
        %vm887 = vcmp.eq.f32.partialorder %v817, inf
        %v888 = vsel %vm887, %v817, %v886
        %vm889 = vcmp.eq.f32.partialorder %v817, 0.0
        %v890 = vand.u32 %v817, 2147483648
        %v891 = vsel %vm889, %v890, %v888
        %v892 = vrsqrt.pop %v818
        %v893 = vmul.f32 %v818, %v892
        %vm894 = vcmp.eq.f32.partialorder %v818, inf
        %v895 = vsel %vm894, %v818, %v893
        %vm896 = vcmp.eq.f32.partialorder %v818, 0.0
        %v897 = vand.u32 %v818, 2147483648
        %v898 = vsel %vm896, %v897, %v895
        %v899 = vrsqrt.pop %v819
        %v900 = vmul.f32 %v819, %v899
        %vm901 = vcmp.eq.f32.partialorder %v819, inf
        %v902 = vsel %vm901, %v819, %v900
        %vm903 = vcmp.eq.f32.partialorder %v819, 0.0
        %v904 = vand.u32 %v819, 2147483648
        %v905 = vsel %vm903, %v904, %v902
        %v906 = vrsqrt.pop %v820
        %v907 = vmul.f32 %v820, %v906
        %vm908 = vcmp.eq.f32.partialorder %v820, inf
        %v909 = vsel %vm908, %v820, %v907
        %vm910 = vcmp.eq.f32.partialorder %v820, 0.0
        %v911 = vand.u32 %v820, 2147483648
        %v912 = vsel %vm910, %v911, %v909
        %v913 = vrsqrt.pop %v821
        %v914 = vmul.f32 %v821, %v913
        %vm915 = vcmp.eq.f32.partialorder %v821, inf
        %v916 = vsel %vm915, %v821, %v914
        %vm917 = vcmp.eq.f32.partialorder %v821, 0.0
        %v918 = vand.u32 %v821, 2147483648
        %v919 = vsel %vm917, %v918, %v916
        %v920 = vrsqrt.pop %v822
        %v921 = vmul.f32 %v822, %v920
        %vm922 = vcmp.eq.f32.partialorder %v822, inf
        %v923 = vsel %vm922, %v822, %v921
        %vm924 = vcmp.eq.f32.partialorder %v822, 0.0
        %v925 = vand.u32 %v822, 2147483648
        %v926 = vsel %vm924, %v925, %v923
        %v927 = vrsqrt.pop %v823
        %v928 = vmul.f32 %v823, %v927
        %vm929 = vcmp.eq.f32.partialorder %v823, inf
        %v930 = vsel %vm929, %v823, %v928
        %vm931 = vcmp.eq.f32.partialorder %v823, 0.0
        %v932 = vand.u32 %v823, 2147483648
        %v933 = vsel %vm931, %v932, %v930
        %v934 = vrsqrt.pop %v824
        %v935 = vmul.f32 %v824, %v934
        %vm936 = vcmp.eq.f32.partialorder %v824, inf
        %v937 = vsel %vm936, %v824, %v935
        %vm938 = vcmp.eq.f32.partialorder %v824, 0.0
        %v939 = vand.u32 %v824, 2147483648
        %v940 = vsel %vm938, %v939, %v937
        %v941 = vrsqrt.pop %v825
        %v942 = vmul.f32 %v825, %v941
        %vm943 = vcmp.eq.f32.partialorder %v825, inf
        %v944 = vsel %vm943, %v825, %v942
        %vm945 = vcmp.eq.f32.partialorder %v825, 0.0
        %v946 = vand.u32 %v825, 2147483648
        %v947 = vsel %vm945, %v946, %v944
        %v948 = vrsqrt.pop %v826
        %v949 = vmul.f32 %v826, %v948
        %vm950 = vcmp.eq.f32.partialorder %v826, inf
        %v951 = vsel %vm950, %v826, %v949
        %vm952 = vcmp.eq.f32.partialorder %v826, 0.0
        %v953 = vand.u32 %v826, 2147483648
        %v954 = vsel %vm952, %v953, %v951
        %v955 = vrsqrt.pop %v849
        %v956 = vrsqrt.pop %v856
        %v957 = vrsqrt.pop %v863
        %v958 = vrsqrt.pop %v870
        %v959 = vrsqrt.pop %v877
        %v960 = vrsqrt.pop %v884
        %v961 = vrsqrt.pop %v891
        %v962 = vrsqrt.pop %v898
        %v963 = vrsqrt.pop %v905
        %v964 = vrsqrt.pop %v912
        %v965 = vrsqrt.pop %v919
        %v966 = vrsqrt.pop %v926
        %v967 = vrsqrt.pop %v933
        %v968 = vrsqrt.pop %v940
        %v969 = vrsqrt.pop %v947
        %v970 = vrsqrt.pop %v954
        %v971 = vmul.f32 %v827, %v955
        %v972 = vmul.f32 %v828, %v956
        %v973 = vmul.f32 %v829, %v957
        %v974 = vmul.f32 %v830, %v958
        %v975 = vmul.f32 %v831, %v959
        %v976 = vmul.f32 %v832, %v960
        %v977 = vmul.f32 %v833, %v961
        %v978 = vmul.f32 %v834, %v962
        %v979 = vmul.f32 %v835, %v963
        %v980 = vmul.f32 %v836, %v964
        %v981 = vmul.f32 %v837, %v965
        %v982 = vmul.f32 %v838, %v966
        %v983 = vmul.f32 %v839, %v967
        %v984 = vmul.f32 %v840, %v968
        %v985 = vmul.f32 %v841, %v969
        %v986 = vmul.f32 %v842, %v970
        %v987 = vmul.f32 %v138, %v971
        %v988 = vmul.f32 %v139, %v972
        %v989 = vmul.f32 %v140, %v973
        %v990 = vmul.f32 %v141, %v974
        %v991 = vmul.f32 %v142, %v975
        %v992 = vmul.f32 %v143, %v976
        %v993 = vmul.f32 %v144, %v977
        %v994 = vmul.f32 %v145, %v978
        %v995 = vmul.f32 %v146, %v979
        %v996 = vmul.f32 %v147, %v980
        %v997 = vmul.f32 %v148, %v981
        %v998 = vmul.f32 %v149, %v982
        %v999 = vmul.f32 %v150, %v983
        %v1000 = vmul.f32 %v151, %v984
        %v1001 = vmul.f32 %v152, %v985
        %v1002 = vmul.f32 %v153, %v986
        %1003 = vst.msk [vmem:[%s135] sm:$0xff] %vm154, %v987
        %1004 = vst.msk [vmem:[%s135 + $0x8] sm:$0xff] %vm154, %v988
        %1005 = vst.msk [vmem:[%s135 + $0x10] sm:$0xff] %vm154, %v989
        %1006 = vst.msk [vmem:[%s135 + $0x18] sm:$0xff] %vm154, %v990
        %1007 = vst.msk [vmem:[%s135 + $0x20] sm:$0xff] %vm154, %v991
        %1008 = vst.msk [vmem:[%s135 + $0x28] sm:$0xff] %vm154, %v992
        %1009 = vst.msk [vmem:[%s135 + $0x30] sm:$0xff] %vm154, %v993
        %1010 = vst.msk [vmem:[%s135 + $0x38] sm:$0xff] %vm154, %v994
        %1011 = vst.msk [vmem:[%s135 + $0x40] sm:$0xff] %vm154, %v995
        %1012 = vst.msk [vmem:[%s135 + $0x48] sm:$0xff] %vm154, %v996
        %1013 = vst.msk [vmem:[%s135 + $0x50] sm:$0xff] %vm154, %v997
        %1014 = vst.msk [vmem:[%s135 + $0x58] sm:$0xff] %vm154, %v998
        %1015 = vst.msk [vmem:[%s135 + $0x60] sm:$0xff] %vm154, %v999
        %1016 = vst.msk [vmem:[%s135 + $0x68] sm:$0xff] %vm154, %v1000
        %1017 = vst.msk [vmem:[%s135 + $0x70] sm:$0xff] %vm154, %v1001
        %1018 = vst.msk [vmem:[%s135 + $0x78] sm:$0xff] %vm154, %v1002
        %s1019 = sand.u32 %s52, 1
        %s1020 = scalar_lea.sflag [#allocation5], %s1019
        %s1021 = sand.u32 %s52, 1
        %s1022 = smul.addr %s1021, 128
        %s1023 = scalar_lea.vmem [#allocation6], %s1022
        // Predicated region
        $region29: #{lrn.1} parent=23 // pred_check
          %p1024 = pneg %p62
        $region30: #{lrn.1} parent=23 // pred_check_branch
          %1026 = sbr.rel (%p1024) target = $region32
        $region31: #{lrn.1} parent=23 // pred_region
          %s1027 = smul.u32 8, %s18
          %s1029 = ssub.s32 2048, 2048
          %1030 = vsyncadd %s1020, %s1029
          %s1031 = smul.addr %s1027, 2
          %s1032 = smul.addr %s1031, 128
          %s1033 = scalar_lea.hbm %s1, %s1032
          %s1034 = sshll.u32 %s1023, 4
          %s1035 = int_to_ptr.vmem [resolvable:$true] %s1034
          %1040 = dma.vmem_to_hbm [thread:$0]  %s1035, 2048, %s1033, %s1020, 128, 128, 8
        $region32: #{lrn.1} parent=23 // pred_fallthru
          _
      $region24: #{lrn.1} parent=5 // pred_fallthru
        _
      %p1041 = scmp.le.s32.totalorder 2, %s13
      // Predicated region
      $region33: #{lrn.1} parent=5 // pred_check
        %p1042 = pneg %p1041
      $region34: #{lrn.1} parent=5 // pred_check_branch
        %1044 = sbr.rel (%p1042) target = $region36
      $region35: #{lrn.1} parent=5 // pred_region
        %s1045 = ssub.s32 %s13, 2
        // Predicated region
        $region37: #{lrn.1} parent=35 // pred_check
          %p1046 = pneg %p68
        $region38: #{lrn.1} parent=35 // pred_check_branch
          %1048 = sbr.rel (%p1046) target = $region40
        $region39: #{lrn.1} parent=35 // pred_region
          %s1049 = sand.u32 %s53, 1
          %s1050 = scalar_lea.sflag [#allocation5], %s1049
          %s1051 = sand.u32 %s53, 1
          %s1052 = smul.addr %s1051, 128
          %s1053 = scalar_lea.vmem [#allocation6], %s1052
          %1054 = dma.done %s1050, 2048
        $region40: #{lrn.1} parent=35 // pred_fallthru
          _
      $region36: #{lrn.1} parent=5 // pred_fallthru
        _
    $region6: #{lrn.1} parent=1 // loop_footer
      %s17 = sadd.s32 1, %s13
    $region7: #{lrn.1} parent=1 // loop_footer_branch
      %12 = sbr.rel target = $region3
    $region8: #{lrn.1} parent=1 // loop_exit
      _
    %1055 = vsyncpa [#allocation4], 1
    %s1056 = scalar_lea.sflag [#allocation4], 1
    %1057 = vsyncpa %s1056, 1
    %1058 = vsyncpa [#allocation5], 1
    %s1059 = scalar_lea.sflag [#allocation5], 1
    %1060 = vsyncpa %s1059, 1

</llo_original>
